<compile_context>
chip_gen: v7x
topology: tpu7x:2x2x1
jax: 0.10.0
libtpu: 0.0.40
codegen_flags: <defaults>
</compile_context>

<pallas_src>
import jax
import jax.numpy as jnp
from jax.experimental import pallas as pl
from jax.experimental.pallas import tpu as pltpu

LANE_W = 512           # lane-dense tile width (multiple of 128)
MAX_BLOCK_ROWS = 1024  # max sublane rows per block (multiple of 8)
NUM_CORES = 2          # leading parallel grid axis (megacore on v7x)
PAD_LOGIT = -1e4       # softplus(PAD_LOGIT) == 0 exactly in f32 -> pad loss 0


def _cdiv(a, b):
    return (a + b - 1) // b


def _round_up(a, b):
    return _cdiv(a, b) * b


def _tiling(n):
    """Choose (rows_padded, block_rows, blocks_per_core) for n elements."""
    rows = max(1, _cdiv(n, LANE_W))
    per_core_rows = _cdiv(rows, NUM_CORES)
    k = max(1, _cdiv(per_core_rows, MAX_BLOCK_ROWS))          # blocks per core
    block_rows = _round_up(_cdiv(rows, NUM_CORES * k), 8)     # <= MAX_BLOCK_ROWS
    rows_padded = NUM_CORES * k * block_rows
    return rows_padded, block_rows, k


def _to_slab(flat, n, rows_padded, pad_value):
    """Flat 1D array -> [rows_padded, LANE_W] slab (pad tail with pad_value)."""
    pad = rows_padded * LANE_W - n
    if pad:
        flat = jnp.pad(flat, (0, pad), constant_values=pad_value)
    return flat.reshape(rows_padded, LANE_W)


def _bce_terms(x, y):
    """Stable pieces of BCE-with-logits (PyTorch form).

    loss = (1 - y) * x + log_weight * softplus(-x)
    with log_weight = 1 + (pos_weight - 1) * y  (== 1 when pos_weight is None).
    """
    sp_neg = jnp.maximum(-x, 0.0) + jnp.log1p(jnp.exp(-jnp.abs(x)))
    return (1.0 - y) * x, sp_neg


def _bce_kernel(x_ref, y_ref, o_ref, acc_ref):
    step = pl.program_id(1)

    @pl.when(step == 0)
    def _init():
        acc_ref[...] = jnp.zeros_like(acc_ref)

    x = x_ref[...].astype(jnp.float32)
    y = y_ref[...].astype(jnp.float32)
    lin, sp_neg = _bce_terms(x, y)
    acc_ref[...] += lin + sp_neg

    @pl.when(step == pl.num_programs(1) - 1)
    def _finish():
        total = jnp.sum(acc_ref[...])
        o_ref[...] = jnp.full((8, 128), total, dtype=jnp.float32)


def _bce_pw_kernel(x_ref, y_ref, w_ref, o_ref, acc_ref):
    step = pl.program_id(1)

    @pl.when(step == 0)
    def _init():
        acc_ref[...] = jnp.zeros_like(acc_ref)

    x = x_ref[...].astype(jnp.float32)
    y = y_ref[...].astype(jnp.float32)
    w = w_ref[...].astype(jnp.float32)
    lin, sp_neg = _bce_terms(x, y)
    log_weight = 1.0 + (w - 1.0) * y
    acc_ref[...] += lin + log_weight * sp_neg

    @pl.when(step == pl.num_programs(1) - 1)
    def _finish():
        total = jnp.sum(acc_ref[...])
        o_ref[...] = jnp.full((8, 128), total, dtype=jnp.float32)


def _call_bce(kernel, slabs, block_rows, k):
    tile_spec = pl.BlockSpec((block_rows, LANE_W),
                             lambda c, i: (c * k + i, 0))
    partials = pl.pallas_call(
        kernel,
        out_shape=jax.ShapeDtypeStruct((NUM_CORES * 8, 128), jnp.float32),
        grid_spec=pltpu.PrefetchScalarGridSpec(
            num_scalar_prefetch=0,
            grid=(NUM_CORES, k),
            in_specs=[tile_spec] * len(slabs),
            out_specs=pl.BlockSpec((8, 128), lambda c, i: (c, 0)),
            scratch_shapes=[pltpu.VMEM((block_rows, LANE_W), jnp.float32)],
        ),
        compiler_params=pltpu.CompilerParams(
            dimension_semantics=("parallel", "arbitrary"),
            vmem_limit_bytes=32 * 1024 * 1024),
    )(*slabs)
    # one partial sum per core row-block
    return partials[0, 0] + partials[8, 0]


@jax.jit
def _loss_no_pw(preds, targets):
    n = preds.size
    rows_padded, block_rows, k = _tiling(n)
    x = _to_slab(preds.reshape(-1), n, rows_padded, PAD_LOGIT)
    y = _to_slab(targets.reshape(-1), n, rows_padded, 0)
    total = _call_bce(_bce_kernel, [x, y], block_rows, k)
    return total / jnp.float32(n)


@jax.jit
def _loss_pw(preds, targets, pos_weight):
    n = preds.size
    rows_padded, block_rows, k = _tiling(n)
    x = _to_slab(preds.reshape(-1), n, rows_padded, PAD_LOGIT)
    y = _to_slab(targets.reshape(-1), n, rows_padded, 0)
    # TODO(synk): a per-channel pos_weight could be read from SMEM via scalar
    # prefetch instead of materializing/streaming the full-size broadcast.
    w_full = jnp.broadcast_to(pos_weight, preds.shape).reshape(-1)
    w = _to_slab(w_full, n, rows_padded, 0)
    total = _call_bce(_bce_pw_kernel, [x, y, w], block_rows, k)
    return total / jnp.float32(n)


def segmentation_loss(preds, targets, pos_weight=None):
    """JAX/Pallas equivalent of SegmentationLoss.forward (mean BCE-with-logits)."""
    if pos_weight is None:
        return _loss_no_pw(preds, targets)
    return _loss_pw(preds, targets, pos_weight)


def _reference(preds, targets, pos_weight=None):
    """Pure-jnp reference of F.binary_cross_entropy_with_logits (mean)."""
    x = preds.astype(jnp.float32)
    y = targets.astype(jnp.float32)
    sp_pos = jnp.logaddexp(0.0, x)    # softplus(x)
    sp_neg = jnp.logaddexp(0.0, -x)   # softplus(-x)
    w = jnp.ones_like(x) if pos_weight is None else jnp.broadcast_to(
        pos_weight, x.shape).astype(jnp.float32)
    return jnp.mean(w * y * sp_neg + (1.0 - y) * sp_pos)


if __name__ == "__main__":
    key = jax.random.PRNGKey(0)
    k1, k2 = jax.random.split(key)

    # preds: logits, targets: {0,1} segmentation masks, NCHW
    preds = jax.random.normal(k1, (2, 4, 16, 16), dtype=jnp.float32)
    targets = (jax.random.uniform(k2, (2, 4, 16, 16)) > 0.5).astype(jnp.float32)
    # per-channel pos_weight, broadcastable against NCHW targets
    pos_weight = jnp.array([1.0, 2.0, 0.5, 3.0], jnp.float32).reshape(1, 4, 1, 1)

    # without pos_weight
    loss_a = segmentation_loss(preds, targets)
    jax.block_until_ready(loss_a)
    ref_a = _reference(preds, targets)

    # with pos_weight
    loss_b = segmentation_loss(preds, targets, pos_weight)
    jax.block_until_ready(loss_b)
    ref_b = _reference(preds, targets, pos_weight)

    assert jnp.allclose(loss_a, ref_a, rtol=1e-5, atol=1e-5), (loss_a, ref_a)
    assert jnp.allclose(loss_b, ref_b, rtol=1e-5, atol=1e-5), (loss_b, ref_b)

    print("KERNEL_OK")
</pallas_src>

<mosaic_0001>
module attributes {stable_mosaic.version = 11 : i64} {
  func.func @_bce_kernel(%arg0: i32, %arg1: i32, %arg2: memref<8x512xf32, #tpu.memory_space<vmem>>, %arg3: memref<8x512xf32, #tpu.memory_space<vmem>>, %arg4: memref<8x128xf32, #tpu.memory_space<vmem>>, %arg5: memref<8x512xf32, #tpu.memory_space<vmem>>) attributes {dimension_semantics = [#tpu.dimension_semantics<parallel>, #tpu.dimension_semantics<arbitrary>], iteration_bounds = array<i64: 2, 1>, scalar_prefetch = 0 : i64, scratch_operands = 1 : i64, tpu.core_type = #tpu.core_type<tc>, window_params = [{transform_indices = @transform_0, window_bounds = array<i64: 8, 512>}, {transform_indices = @transform_1, window_bounds = array<i64: 8, 512>}, {transform_indices = @transform_2, window_bounds = array<i64: 8, 128>}]} {
    %c0_i32 = arith.constant 0 : i32
    %0 = arith.cmpi eq, %arg1, %c0_i32 : i32
    %1 = arith.extui %0 : i1 to i32
    %c0_i32_0 = arith.constant 0 : i32
    %2 = arith.cmpi ne, %1, %c0_i32_0 : i32
    scf.if %2 {
      %cst_13 = arith.constant 0.000000e+00 : f32
      %25 = vector.broadcast %cst_13 : f32 to vector<8x512xf32>
      %c0_14 = arith.constant 0 : index
      %c0_15 = arith.constant 0 : index
      %26 = vector.load %arg5[%c0_14, %c0_15] : memref<8x512xf32, #tpu.memory_space<vmem>>, vector<8x512xf32>
      tpu.vector_store %arg5[%c0_14, %c0_15], %25 {strides = array<i32>} : memref<8x512xf32, #tpu.memory_space<vmem>>, vector<8x512xf32>,
    } else {
    }
    %c0 = arith.constant 0 : index
    %c0_1 = arith.constant 0 : index
    %3 = vector.load %arg2[%c0, %c0_1] : memref<8x512xf32, #tpu.memory_space<vmem>>, vector<8x512xf32>
    %c0_2 = arith.constant 0 : index
    %c0_3 = arith.constant 0 : index
    %4 = vector.load %arg3[%c0_2, %c0_3] : memref<8x512xf32, #tpu.memory_space<vmem>>, vector<8x512xf32>
    %cst = arith.constant 0.000000e+00 : f32
    %5 = vector.broadcast %cst : f32 to vector<8x512xf32>
    %6 = arith.subf %5, %3 : vector<8x512xf32>
    %cst_4 = arith.constant 0.000000e+00 : f32
    %7 = vector.broadcast %cst_4 : f32 to vector<8x512xf32>
    %8 = arith.maximumf %6, %7 : vector<8x512xf32>
    %9 = math.absf %3 : vector<8x512xf32>
    %cst_5 = arith.constant 0.000000e+00 : f32
    %10 = vector.broadcast %cst_5 : f32 to vector<8x512xf32>
    %11 = arith.subf %10, %9 : vector<8x512xf32>
    %12 = math.exp %11 : vector<8x512xf32>
    %13 = math.log1p %12 : vector<8x512xf32>
    %14 = arith.addf %8, %13 : vector<8x512xf32>
    %cst_6 = arith.constant 1.000000e+00 : f32
    %15 = vector.broadcast %cst_6 : f32 to vector<8x512xf32>
    %16 = arith.subf %15, %4 : vector<8x512xf32>
    %17 = arith.mulf %16, %3 : vector<8x512xf32>
    %c0_7 = arith.constant 0 : index
    %c0_8 = arith.constant 0 : index
    %18 = vector.load %arg5[%c0_7, %c0_8] : memref<8x512xf32, #tpu.memory_space<vmem>>, vector<8x512xf32>
    %19 = arith.addf %17, %14 : vector<8x512xf32>
    %20 = arith.addf %18, %19 : vector<8x512xf32>
    %c0_9 = arith.constant 0 : index
    %c0_10 = arith.constant 0 : index
    %21 = vector.load %arg5[%c0_9, %c0_10] : memref<8x512xf32, #tpu.memory_space<vmem>>, vector<8x512xf32>
    tpu.vector_store %arg5[%c0_9, %c0_10], %20 {strides = array<i32>} : memref<8x512xf32, #tpu.memory_space<vmem>>, vector<8x512xf32>,
    %c0_i32_11 = arith.constant 0 : i32
    %22 = arith.cmpi eq, %arg1, %c0_i32_11 : i32
    %23 = arith.extui %22 : i1 to i32
    %c0_i32_12 = arith.constant 0 : i32
    %24 = arith.cmpi ne, %23, %c0_i32_12 : i32
    scf.if %24 {
      %c0_13 = arith.constant 0 : index
      %c0_14 = arith.constant 0 : index
      %25 = vector.load %arg5[%c0_13, %c0_14] : memref<8x512xf32, #tpu.memory_space<vmem>>, vector<8x512xf32>
      %26 = vector.shape_cast %25 : vector<8x512xf32> to vector<1x8x512xf32>
      %cst_15 = arith.constant dense<0.000000e+00> : vector<1xf32>
      %27 = vector.multi_reduction <add>, %26, %cst_15 [1, 2] : vector<1x8x512xf32> to vector<1xf32>
      %28 = vector.shape_cast %27 : vector<1xf32> to vector<1x1x1xf32>
      %29 = vector.extract %28[0, 0, 0] : f32 from vector<1x1x1xf32>
      %30 = vector.broadcast %29 : f32 to vector<8x128xf32>
      %c0_16 = arith.constant 0 : index
      %c0_17 = arith.constant 0 : index
      %31 = vector.load %arg4[%c0_16, %c0_17] : memref<8x128xf32, #tpu.memory_space<vmem>>, vector<8x128xf32>
      tpu.vector_store %arg4[%c0_16, %c0_17], %30 {strides = array<i32>} : memref<8x128xf32, #tpu.memory_space<vmem>>, vector<8x128xf32>,
    } else {
    }
    return
  }
  func.func @transform_0(%arg0: i32, %arg1: i32) -> (i32, i32) {
    %c1_i32 = arith.constant 1 : i32
    %0 = arith.muli %arg0, %c1_i32 : i32
    %1 = arith.addi %0, %arg1 : i32
    %c0_i32 = arith.constant 0 : i32
    %c0_i32_0 = arith.constant 0 : i32
    return %1, %c0_i32 : i32, i32
  }
  func.func @transform_1(%arg0: i32, %arg1: i32) -> (i32, i32) {
    %c1_i32 = arith.constant 1 : i32
    %0 = arith.muli %arg0, %c1_i32 : i32
    %1 = arith.addi %0, %arg1 : i32
    %c0_i32 = arith.constant 0 : i32
    %c0_i32_0 = arith.constant 0 : i32
    return %1, %c0_i32 : i32, i32
  }
  func.func @transform_2(%arg0: i32, %arg1: i32) -> (i32, i32) {
    %c0_i32 = arith.constant 0 : i32
    %c0_i32_0 = arith.constant 0 : i32
    return %arg0, %c0_i32 : i32, i32
  }
}

</mosaic_0001>

<llo_original>
// kernel: _loss_no_pw.1
$region0: #{_loss_no_pw.1}
  #allocation0 [shape = 'u32[]', space=smem, size = 0x4, offset = 0x4, fixed_abs, tag = 'smem constant byte address 0x4 - core index']
  #allocation1 [shape = 'u32[144,128]{1,0:T(1,128)}', space=vmem, size = 0x12000, scoped, tag = 'internal scratch']
  #allocation2 [shape = 'f32[8,512]{1,0:T(8,128)}', space=vmem, size = 0x4000, scoped, tag = 'scratch operand']
  %s0 = inlined_call_operand.vmem [shape: f32[16,512], index: 0, kind: input, shape index: {}]
  %s1 = inlined_call_operand.vmem [shape: f32[16,512], index: 1, kind: input, shape index: {}]
  %s2 = inlined_call_operand.vmem [shape: f32[16,128], index: 2, kind: output, shape index: {}]
  %s3 = sld [smem:[#allocation0]]
  $region49: #{_loss_no_pw.1} parent=0
    _
  %s5 = ssub.s32 1, %s3
  %s6 = scalar_select 0, %s5, %s3
  loop: start=0, step=1, limit=4
  $region2: #{_loss_no_pw.1} parent=0 // loop_pre_header
    _
  $region3: #{_loss_no_pw.1} parent=0 // loop_header
    %s8 = sphi 0, %s12
    %p9 = scmp.ge.s32.totalorder %s8, 4
    %s15 = sphi 0, %s27
    %s16 = sphi 0, %s23
    %s17 = sphi 0, %s15
    %s18 = sphi 0, %s16
    %s19 = sphi 0, %s17
    %s20 = sphi 0, %s18
    %s32 = sphi 0, %s34
    %s35 = sphi 0, %s32
    %s36 = sphi 0, %s35
    %s52 = sphi 0, %s36
    %s60 = sphi 0, %s62
    %s63 = sphi 0, %s60
    %s64 = sphi 0, %s63
    %s80 = sphi 0, %s64
    %s86 = sphi 0, %s88
    %s89 = sphi 0, %s86
    %s90 = sphi 0, %s89
    %s106 = sphi 0, %s90
  $region4: #{_loss_no_pw.1} parent=0 // loop_header_branch
    %11 = sbr.rel (%p9) target = $region8
  $region5: #{_loss_no_pw.1} parent=0 // loop_body
    %s13 = ssub.s32 %s8, 1
    %s14 = ssub.s32 %s8, 2
    %s21 = sadd.s32 1, %s16
    %p22 = scmp.ge.s32.totalorder %s21, 1
    %s23 = scalar_select %p22, 0, %s21
    %s24 = sadd.s32 1, %s15
    %s25 = scalar_select %p22, %s24, %s15
    %p26 = scmp.ge.s32.totalorder %s25, 2
    %s27 = scalar_select %p26, 0, %s25
    %s28 = sadd.s32 %s15, %s16
    %s29 = sadd.s32 %s27, %s23
    %s30 = ssub.s32 %s28, %s29
    %p31 = scmp.eq.s32.totalorder %s30, 0
    %s33 = sadd.s32 %s32, 1
    %s34 = scalar_select %p31, %s32, %s33
    %p37 = pneg %p31
    %p38 = scmp.eq.s32.totalorder %s8, 1
    %p39 = por %p37, %p38
    %p40 = scmp.ne.s32.totalorder %s32, %s35
    %p41 = scmp.eq.s32.totalorder %s8, 0
    %p42 = por %p40, %p41
    %p43 = scmp.ne.s32.totalorder %s32, %s35
    %p44 = scmp.eq.s32.totalorder %s13, 1
    %p45 = por %p43, %p44
    %p46 = scmp.ne.s32.totalorder %s35, %s36
    %p47 = scmp.eq.s32.totalorder %s13, 0
    %p48 = por %p46, %p47
    %p49 = scmp.ne.s32.totalorder %s35, %s36
    %p50 = scmp.eq.s32.totalorder %s14, 1
    %p51 = por %p49, %p50
    %p53 = scmp.ne.s32.totalorder %s36, %s52
    %p54 = scmp.eq.s32.totalorder %s14, 0
    %p55 = por %p53, %p54
    %s56 = sadd.s32 %s15, %s16
    %s57 = sadd.s32 %s27, %s23
    %s58 = ssub.s32 %s56, %s57
    %p59 = scmp.eq.s32.totalorder %s58, 0
    %s61 = sadd.s32 %s60, 1
    %s62 = scalar_select %p59, %s60, %s61
    %p65 = pneg %p59
    %p66 = scmp.eq.s32.totalorder %s8, 1
    %p67 = por %p65, %p66
    %p68 = scmp.ne.s32.totalorder %s60, %s63
    %p69 = scmp.eq.s32.totalorder %s8, 0
    %p70 = por %p68, %p69
    %p71 = scmp.ne.s32.totalorder %s60, %s63
    %p72 = scmp.eq.s32.totalorder %s13, 1
    %p73 = por %p71, %p72
    %p74 = scmp.ne.s32.totalorder %s63, %s64
    %p75 = scmp.eq.s32.totalorder %s13, 0
    %p76 = por %p74, %p75
    %p77 = scmp.ne.s32.totalorder %s63, %s64
    %p78 = scmp.eq.s32.totalorder %s14, 1
    %p79 = por %p77, %p78
    %p81 = scmp.ne.s32.totalorder %s64, %s80
    %p82 = scmp.eq.s32.totalorder %s14, 0
    %p83 = por %p81, %p82
    %s84 = ssub.s32 %s15, %s27
    %p85 = scmp.eq.s32.totalorder %s84, 0
    %s87 = sadd.s32 %s86, 1
    %s88 = scalar_select %p85, %s86, %s87
    %p91 = pneg %p85
    %p92 = scmp.eq.s32.totalorder %s8, 1
    %p93 = por %p91, %p92
    %p94 = scmp.ne.s32.totalorder %s86, %s89
    %p95 = scmp.eq.s32.totalorder %s8, 0
    %p96 = por %p94, %p95
    %p97 = scmp.ne.s32.totalorder %s86, %s89
    %p98 = scmp.eq.s32.totalorder %s13, 1
    %p99 = por %p97, %p98
    %p100 = scmp.ne.s32.totalorder %s89, %s90
    %p101 = scmp.eq.s32.totalorder %s13, 0
    %p102 = por %p100, %p101
    %p103 = scmp.ne.s32.totalorder %s89, %s90
    %p104 = scmp.eq.s32.totalorder %s14, 1
    %p105 = por %p103, %p104
    %p107 = scmp.ne.s32.totalorder %s90, %s106
    %p108 = scmp.eq.s32.totalorder %s14, 0
    %p109 = por %p107, %p108
    %p110 = scmp.le.s32.totalorder 1, %s8
    %p111 = scmp.lt.s32.totalorder %s8, 3
    %p112 = pnand %p110, %p111
    %p113 = pneg %p112
    // Predicated region
    $region9: #{_loss_no_pw.1} parent=5 // pred_check
      _
    $region10: #{_loss_no_pw.1} parent=5 // pred_check_branch
      %115 = sbr.rel (%p112) target = $region12
    $region11: #{_loss_no_pw.1} parent=5 // pred_region
      %s116 = ssub.s32 %s8, 1
    $region12: #{_loss_no_pw.1} parent=5 // pred_fallthru
      _
    %p117 = scmp.lt.s32.totalorder %s8, 2
    // Predicated region
    $region13: #{_loss_no_pw.1} parent=5 // pred_check
      %p118 = pneg %p117
    $region14: #{_loss_no_pw.1} parent=5 // pred_check_branch
      %120 = sbr.rel (%p118) target = $region16
    $region15: #{_loss_no_pw.1} parent=5 // pred_region
      // Predicated region
      $region17: #{_loss_no_pw.1} parent=15 // pred_check
        %p121 = pneg %p42
      $region18: #{_loss_no_pw.1} parent=15 // pred_check_branch
        %123 = sbr.rel (%p121) target = $region20
      $region19: #{_loss_no_pw.1} parent=15 // pred_region
        %s124 = sadd.s32 %s15, %s16
        %p125 = scmp.lt.s32.totalorder %s124, 1
        %s126 = scalar_select %p125, %s124, 1
        %s127 = smul.addr %s126, 4
        %s128 = smul.addr %s127, 8
        %s129 = scalar_lea.vmem %s0, %s128
        %s130 = sadd.s32 %s15, %s16
      $region20: #{_loss_no_pw.1} parent=15 // pred_fallthru
        _
      // Predicated region
      $region21: #{_loss_no_pw.1} parent=15 // pred_check
        %p131 = pneg %p70
      $region22: #{_loss_no_pw.1} parent=15 // pred_check_branch
        %133 = sbr.rel (%p131) target = $region24
      $region23: #{_loss_no_pw.1} parent=15 // pred_region
        %s134 = sadd.s32 %s15, %s16
        %p135 = scmp.lt.s32.totalorder %s134, 1
        %s136 = scalar_select %p135, %s134, 1
        %s137 = smul.addr %s136, 4
        %s138 = smul.addr %s137, 8
        %s139 = scalar_lea.vmem %s1, %s138
        %s140 = sadd.s32 %s15, %s16
      $region24: #{_loss_no_pw.1} parent=15 // pred_fallthru
        _
    $region16: #{_loss_no_pw.1} parent=5 // pred_fallthru
      _
    %p141 = scmp.le.s32.totalorder 1, %s8
    %p142 = scmp.lt.s32.totalorder %s8, 3
    %p143 = pnand %p141, %p142
    %p144 = pneg %p143
    // Predicated region
    $region25: #{_loss_no_pw.1} parent=5 // pred_check
      _
    $region26: #{_loss_no_pw.1} parent=5 // pred_check_branch
      %146 = sbr.rel (%p143) target = $region28
    $region27: #{_loss_no_pw.1} parent=5 // pred_region
      %s147 = ssub.s32 %s8, 1
      %s148 = sadd.s32 %s17, %s18
      %p149 = scmp.lt.s32.totalorder %s148, 1
      %s150 = scalar_select %p149, %s148, 1
      %s151 = smul.addr %s150, 4
      %s152 = smul.addr %s151, 8
      %s153 = scalar_lea.vmem %s0, %s152
      %p154 = pneg %p48
      %p155 = pneg %p45
      %s156 = sadd.s32 %s17, %s18
      %p157 = scmp.lt.s32.totalorder %s156, 1
      %s158 = scalar_select %p157, %s156, 1
      %s159 = smul.addr %s158, 4
      %s160 = smul.addr %s159, 8
      %s161 = scalar_lea.vmem %s1, %s160
      %p162 = pneg %p76
      %p163 = pneg %p73
      %p164 = pneg %p102
      %p165 = pneg %p99
      %p166 = scmp.lt.s32.totalorder %s17, 1
      %s167 = scalar_select %p166, %s17, 1
      %s168 = smul.addr %s167, 8
      %s169 = scalar_lea.vmem %s2, %s168
      %s170 = sadd.s32 %s17, %s18
      %p171 = scmp.lt.s32.totalorder %s170, 1
      %s172 = scalar_select %p171, %s170, 1
      %s173 = smul.addr %s172, 4
      %s174 = smul.addr %s173, 8
      %s175 = scalar_lea.vmem %s0, %s174
      %s176 = sadd.s32 %s17, %s18
      %s177 = sadd.s32 %s17, %s18
      %p178 = scmp.lt.s32.totalorder %s177, 1
      %s179 = scalar_select %p178, %s177, 1
      %s180 = smul.addr %s179, 4
      %s181 = smul.addr %s180, 8
      %s182 = scalar_lea.vmem %s1, %s181
      %s183 = sadd.s32 %s17, %s18
      %p184 = scmp.lt.s32.totalorder %s17, 1
      %s185 = scalar_select %p184, %s17, 1
      %s186 = smul.addr %s185, 8
      %s187 = scalar_lea.vmem %s2, %s186
      %p188 = scmp.eq.s32.totalorder %s18, 0
      // Predicated region
      $region29: #{_loss_no_pw.1} parent=27 // pred_check
        %p189 = pneg %p188
      $region30: #{_loss_no_pw.1} parent=27 // pred_check_branch
        %191 = sbr.rel (%p189) target = $region32
      $region31: #{_loss_no_pw.1} parent=27 // pred_region
        %192 = vst [vmem:[#allocation2] sm:$0xff] 0.0
        %193 = vst [vmem:[#allocation2 + $0x8] sm:$0xff] 0.0
        %194 = vst [vmem:[#allocation2 + $0x10] sm:$0xff] 0.0
        %195 = vst [vmem:[#allocation2 + $0x18] sm:$0xff] 0.0
      $region32: #{_loss_no_pw.1} parent=27 // pred_fallthru
        _
      %v196 = vld [vmem:[%s175] sm:$0xff]
      %v197 = vld [vmem:[%s175 + $0x8] sm:$0xff]
      %v198 = vld [vmem:[%s175 + $0x10] sm:$0xff]
      %v199 = vld [vmem:[%s175 + $0x18] sm:$0xff]
      %v200 = vld [vmem:[%s182] sm:$0xff]
      %v201 = vld [vmem:[%s182 + $0x8] sm:$0xff]
      %v202 = vld [vmem:[%s182 + $0x10] sm:$0xff]
      %v203 = vld [vmem:[%s182 + $0x18] sm:$0xff]
      %v204 = vsub.f32 0.0, %v196
      %v205 = vsub.f32 0.0, %v197
      %v206 = vsub.f32 0.0, %v198
      %v207 = vsub.f32 0.0, %v199
      %v208 = vmax.f32 %v204, 0.0
      %v209 = vmax.f32 %v205, 0.0
      %v210 = vmax.f32 %v206, 0.0
      %v211 = vmax.f32 %v207, 0.0
      %v212 = vand.u32 2147483647, %v196
      %v213 = vand.u32 2147483647, %v197
      %v214 = vand.u32 2147483647, %v198
      %v215 = vand.u32 2147483647, %v199
      %v216 = vsub.f32 0.0, %v212
      %v217 = vsub.f32 0.0, %v213
      %v218 = vsub.f32 0.0, %v214
      %v219 = vsub.f32 0.0, %v215
      %v220 = vmul.f32 %v216, 1.442695
      %v221 = vpow.pop %v220
      %v222 = vmul.f32 %v217, 1.442695
      %v223 = vpow.pop %v222
      %v224 = vmul.f32 %v218, 1.442695
      %v225 = vpow.pop %v224
      %v226 = vmul.f32 %v219, 1.442695
      %v227 = vpow.pop %v226
      %v228 = vadd.f32 %v221, 1.0
      %v229 = vlog2.pop %v228
      %v230 = vmul.f32 %v229, 0.6931472
      %v231 = vmul.f32 -0.5, %v221
      %v232 = vadd.f32 %v231, 1.0
      %v233 = vmul.f32 %v232, %v221
      %v234 = vand.u32 2147483647, %v221
      %vm235 = vcmp.lt.f32.partialorder %v234, 0.0004427343
      %v236 = vsel %vm235, %v233, %v230
      %v237 = vadd.f32 %v223, 1.0
      %v238 = vlog2.pop %v237
      %v239 = vmul.f32 %v238, 0.6931472
      %v240 = vmul.f32 -0.5, %v223
      %v241 = vadd.f32 %v240, 1.0
      %v242 = vmul.f32 %v241, %v223
      %v243 = vand.u32 2147483647, %v223
      %vm244 = vcmp.lt.f32.partialorder %v243, 0.0004427343
      %v245 = vsel %vm244, %v242, %v239
      %v246 = vadd.f32 %v225, 1.0
      %v247 = vlog2.pop %v246
      %v248 = vmul.f32 %v247, 0.6931472
      %v249 = vmul.f32 -0.5, %v225
      %v250 = vadd.f32 %v249, 1.0
      %v251 = vmul.f32 %v250, %v225
      %v252 = vand.u32 2147483647, %v225
      %vm253 = vcmp.lt.f32.partialorder %v252, 0.0004427343
      %v254 = vsel %vm253, %v251, %v248
      %v255 = vadd.f32 %v227, 1.0
      %v256 = vlog2.pop %v255
      %v257 = vmul.f32 %v256, 0.6931472
      %v258 = vmul.f32 -0.5, %v227
      %v259 = vadd.f32 %v258, 1.0
      %v260 = vmul.f32 %v259, %v227
      %v261 = vand.u32 2147483647, %v227
      %vm262 = vcmp.lt.f32.partialorder %v261, 0.0004427343
      %v263 = vsel %vm262, %v260, %v257
      %v264 = vadd.f32 %v208, %v236
      %v265 = vadd.f32 %v209, %v245
      %v266 = vadd.f32 %v210, %v254
      %v267 = vadd.f32 %v211, %v263
      %v268 = vsub.f32 1.0, %v200
      %v269 = vsub.f32 1.0, %v201
      %v270 = vsub.f32 1.0, %v202
      %v271 = vsub.f32 1.0, %v203
      %v272 = vmul.f32 %v268, %v196
      %v273 = vmul.f32 %v269, %v197
      %v274 = vmul.f32 %v270, %v198
      %v275 = vmul.f32 %v271, %v199
      %v276 = vld [vmem:[#allocation2] sm:$0xff]
      %v277 = vld [vmem:[#allocation2 + $0x8] sm:$0xff]
      %v278 = vld [vmem:[#allocation2 + $0x10] sm:$0xff]
      %v279 = vld [vmem:[#allocation2 + $0x18] sm:$0xff]
      %v280 = vadd.f32 %v272, %v264
      %v281 = vadd.f32 %v273, %v265
      %v282 = vadd.f32 %v274, %v266
      %v283 = vadd.f32 %v275, %v267
      %v284 = vadd.f32 %v276, %v280
      %v285 = vadd.f32 %v277, %v281
      %v286 = vadd.f32 %v278, %v282
      %v287 = vadd.f32 %v279, %v283
      %288 = vst [vmem:[#allocation2] sm:$0xff] %v284
      %289 = vst [vmem:[#allocation2 + $0x8] sm:$0xff] %v285
      %290 = vst [vmem:[#allocation2 + $0x10] sm:$0xff] %v286
      %291 = vst [vmem:[#allocation2 + $0x18] sm:$0xff] %v287
      // Predicated region
      $region33: #{_loss_no_pw.1} parent=27 // pred_check
        %p292 = pneg %p188
      $region34: #{_loss_no_pw.1} parent=27 // pred_check_branch
        %294 = sbr.rel (%p292) target = $region36
      $region35: #{_loss_no_pw.1} parent=27 // pred_region
        %v295 = vld [vmem:[#allocation2] sm:$0xff]
        %v296 = vld [vmem:[#allocation2 + $0x8] sm:$0xff]
        %v297 = vld [vmem:[#allocation2 + $0x10] sm:$0xff]
        %v298 = vld [vmem:[#allocation2 + $0x18] sm:$0xff]
        %v299 = vadd.f32 %v295, %v296
        %v300 = vadd.f32 %v299, %v297
        %v301 = vadd.f32 %v300, %v298
        %302 = vadd.xlane.f32.xlu0 %v301
        %v303 = vpop.xlane.xlu0 %302
        %v304 = vrot.slane %v303, 4
        %v305 = vadd.f32 %v303, %v304
        %v306 = vrot.slane %v305, 2
        %v307 = vadd.f32 %v305, %v306
        %v308 = vrot.slane %v307, 1
        %v309 = vadd.f32 %v307, %v308
        %s310 = vtos %v309
        %v311 = vstv %s310
        %312 = vst [vmem:[%s187] sm:$0xff] %v311
      $region36: #{_loss_no_pw.1} parent=27 // pred_fallthru
        _
      %p313 = scmp.lt.s32.totalorder %s17, 1
      %s314 = scalar_select %p313, %s17, 1
      %s315 = smul.addr %s314, 8
      %s316 = scalar_lea.vmem %s2, %s315
      // Predicated region
      $region37: #{_loss_no_pw.1} parent=27 // pred_check
        %p317 = pneg %p99
      $region38: #{_loss_no_pw.1} parent=27 // pred_check_branch
        %319 = sbr.rel (%p317) target = $region40
      $region39: #{_loss_no_pw.1} parent=27 // pred_region
        _
      $region40: #{_loss_no_pw.1} parent=27 // pred_fallthru
        _
    $region28: #{_loss_no_pw.1} parent=5 // pred_fallthru
      _
    %p320 = scmp.le.s32.totalorder 2, %s8
    // Predicated region
    $region41: #{_loss_no_pw.1} parent=5 // pred_check
      %p321 = pneg %p320
    $region42: #{_loss_no_pw.1} parent=5 // pred_check_branch
      %323 = sbr.rel (%p321) target = $region44
    $region43: #{_loss_no_pw.1} parent=5 // pred_region
      %s324 = ssub.s32 %s8, 2
      // Predicated region
      $region45: #{_loss_no_pw.1} parent=43 // pred_check
        %p325 = pneg %p105
      $region46: #{_loss_no_pw.1} parent=43 // pred_check_branch
        %327 = sbr.rel (%p325) target = $region48
      $region47: #{_loss_no_pw.1} parent=43 // pred_region
        %p328 = scmp.lt.s32.totalorder %s19, 1
        %s329 = scalar_select %p328, %s19, 1
        %s330 = smul.addr %s329, 8
        %s331 = scalar_lea.vmem %s2, %s330
      $region48: #{_loss_no_pw.1} parent=43 // pred_fallthru
        _
    $region44: #{_loss_no_pw.1} parent=5 // pred_fallthru
      _
  $region6: #{_loss_no_pw.1} parent=0 // loop_footer
    %s12 = sadd.s32 1, %s8
  $region7: #{_loss_no_pw.1} parent=0 // loop_footer_branch
    %7 = sbr.rel target = $region3
  $region8: #{_loss_no_pw.1} parent=0 // loop_exit
    _

</llo_original>
